<compile_context>
chip_gen: v5e
topology: v5e:2x2
jax: 0.10.0
libtpu: 0.0.40
codegen_flags: <defaults>
</compile_context>

<pallas_src>
import math
import functools

import jax
import jax.numpy as jnp
from jax.experimental import pallas as pl
from jax.experimental.pallas import tpu as pltpu


# Scoped-VMEM limit that is safe on every generation (v5e default 16 MiB,
# v6e default 32 MiB, v7x 64 MiB physical).
_VMEM_LIMIT = 40 * 1024 * 1024


# ----------------------------- tiling helpers -----------------------------

def _tile(dim, preferred, aligns=(128, 8)):
    """Largest tile t <= preferred with dim % t == 0 and t % align == 0.

    Tries the alignments in order (128 first for MXU/lane friendliness, then
    8 for sublane-only dims).  Falls back to the full dimension, which is
    always a legal block (block == array extent).
    """
    if dim <= preferred:
        return dim
    for align in aligns:
        t = (preferred // align) * align
        while t >= align:
            if dim % t == 0:
                return t
            t -= align
    # TODO(synk): pad awkward dims at init instead of full-extent fallback.
    return dim


# ----------------------------- Pallas kernels -----------------------------

def _layernorm_kernel(x_ref, g_ref, b_ref, o_ref):
    x = x_ref[...].astype(jnp.float32)
    mean = jnp.mean(x, axis=-1, keepdims=True)
    var = jnp.mean(jnp.square(x - mean), axis=-1, keepdims=True)
    xn = (x - mean) * jax.lax.rsqrt(var + 1e-5)
    o_ref[...] = (xn * g_ref[...].astype(jnp.float32)
                  + b_ref[...].astype(jnp.float32)).astype(o_ref.dtype)


def _add_layernorm_kernel(x_ref, d_ref, g_ref, b_ref, r_ref, y_ref):
    """Fused residual add + LayerNorm: r = x + d ; y = LN(r)."""
    r32 = x_ref[...].astype(jnp.float32) + d_ref[...].astype(jnp.float32)
    r_ref[...] = r32.astype(r_ref.dtype)
    mean = jnp.mean(r32, axis=-1, keepdims=True)
    var = jnp.mean(jnp.square(r32 - mean), axis=-1, keepdims=True)
    xn = (r32 - mean) * jax.lax.rsqrt(var + 1e-5)
    y_ref[...] = (xn * g_ref[...].astype(jnp.float32)
                  + b_ref[...].astype(jnp.float32)).astype(y_ref.dtype)


def _linear_kernel(x_ref, w_ref, b_ref, o_ref, acc_ref, *, activation):
    """Tiled x @ w + b; bf16 MXU operands, f32 accumulation over the K axis."""
    @pl.when(pl.program_id(2) == 0)
    def _():
        acc_ref[...] = jnp.zeros_like(acc_ref)

    acc_ref[...] += jnp.dot(x_ref[...].astype(jnp.bfloat16),
                            w_ref[...].astype(jnp.bfloat16),
                            preferred_element_type=jnp.float32)

    @pl.when(pl.program_id(2) == pl.num_programs(2) - 1)
    def _():
        y = acc_ref[...] + b_ref[...].astype(jnp.float32)
        if activation == "gelu_tanh":
            # tanh runs on the EUP (separate slot); TODO(synk): if the bundle
            # shows EUP saturation, switch to a VPU polynomial approximation.
            c = math.sqrt(2.0 / math.pi)
            y = 0.5 * y * (1.0 + jnp.tanh(c * (y + 0.044715 * y * y * y)))
        o_ref[...] = y.astype(o_ref.dtype)


def _lm_head_kernel(x_ref, w_ref, o_ref):
    """x @ w where w is the pre-transposed (D, V) tied embedding. Full-K."""
    o_ref[...] = jnp.dot(x_ref[...].astype(jnp.bfloat16),
                         w_ref[...].astype(jnp.bfloat16),
                         preferred_element_type=jnp.float32).astype(o_ref.dtype)


def _flash_attn_kernel(q_ref, k_ref, v_ref, o_ref, m_ref, l_ref, acc_ref,
                       *, scale, tq, tkv):
    qi = pl.program_id(1)
    ki = pl.program_id(2)

    @pl.when(ki == 0)
    def _():
        m_ref[...] = jnp.full_like(m_ref, -1e30)
        l_ref[...] = jnp.zeros_like(l_ref)
        acc_ref[...] = jnp.zeros_like(acc_ref)

    # Causal tile skip (the k/v index_map also clamps so skipped tiles are
    # not even DMA'd).
    @pl.when(ki * tkv < (qi + 1) * tq)
    def _():
        q = q_ref[0, 0].astype(jnp.bfloat16)                 # (tq, Dh)
        k = k_ref[0, 0].astype(jnp.bfloat16)                 # (tkv, Dh)
        v = v_ref[0, 0].astype(jnp.bfloat16)                 # (tkv, Dh)
        s = jax.lax.dot_general(q, k, (((1,), (1,)), ((), ())),
                                preferred_element_type=jnp.float32) * scale
        row = jax.lax.broadcasted_iota(jnp.int32, s.shape, 0) + qi * tq
        col = jax.lax.broadcasted_iota(jnp.int32, s.shape, 1) + ki * tkv
        s = jnp.where(col <= row, s, -1e30)                  # causal mask (f32)

        m_prev = m_ref[...]
        m_new = jnp.maximum(m_prev, jnp.max(s, axis=-1, keepdims=True))
        alpha = jnp.exp(m_prev - m_new)
        p = jnp.exp(s - m_new)
        l_ref[...] = alpha * l_ref[...] + jnp.sum(p, axis=-1, keepdims=True)
        acc_ref[...] = alpha * acc_ref[...] + jnp.dot(
            p.astype(jnp.bfloat16), v, preferred_element_type=jnp.float32)
        m_ref[...] = m_new

    @pl.when(ki == pl.num_programs(2) - 1)
    def _():
        inv = pl.reciprocal(l_ref[...], approx=True)
        o_ref[0] = (acc_ref[...] * inv).astype(o_ref.dtype)


# ----------------------------- kernel wrappers -----------------------------

def layernorm(x2, gamma, beta):
    """x2: (N, D) -> LN(x2)."""
    N, D = x2.shape
    tm = _tile(N, 1024, aligns=(128, 8))
    return pl.pallas_call(
        _layernorm_kernel,
        out_shape=jax.ShapeDtypeStruct((N, D), x2.dtype),
        grid=(N // tm,),
        in_specs=[pl.BlockSpec((tm, D), lambda i: (i, 0)),
                  pl.BlockSpec((1, D), lambda i: (0, 0)),
                  pl.BlockSpec((1, D), lambda i: (0, 0))],
        out_specs=pl.BlockSpec((tm, D), lambda i: (i, 0)),
        compiler_params=pltpu.CompilerParams(
            dimension_semantics=("parallel",),
            vmem_limit_bytes=_VMEM_LIMIT),
    )(x2, gamma.reshape(1, D), beta.reshape(1, D))


def add_layernorm(x2, d2, gamma, beta):
    """Fused residual + LayerNorm: returns (x2 + d2, LN(x2 + d2))."""
    N, D = x2.shape
    tm = _tile(N, 1024, aligns=(128, 8))
    return pl.pallas_call(
        _add_layernorm_kernel,
        out_shape=(jax.ShapeDtypeStruct((N, D), x2.dtype),
                   jax.ShapeDtypeStruct((N, D), x2.dtype)),
        grid=(N // tm,),
        in_specs=[pl.BlockSpec((tm, D), lambda i: (i, 0)),
                  pl.BlockSpec((tm, D), lambda i: (i, 0)),
                  pl.BlockSpec((1, D), lambda i: (0, 0)),
                  pl.BlockSpec((1, D), lambda i: (0, 0))],
        out_specs=[pl.BlockSpec((tm, D), lambda i: (i, 0)),
                   pl.BlockSpec((tm, D), lambda i: (i, 0))],
        compiler_params=pltpu.CompilerParams(
            dimension_semantics=("parallel",),
            vmem_limit_bytes=_VMEM_LIMIT),
    )(x2, d2, gamma.reshape(1, D), beta.reshape(1, D))


def linear(x2, w, b, activation=None):
    """x2: (M, K), w: (K, N), b: (N,) -> (M, N); tiled, K-accumulated."""
    M, K = x2.shape
    N = w.shape[1]
    tm = _tile(M, 512, aligns=(128, 8))
    tn = _tile(N, 512, aligns=(128,))
    tk = _tile(K, 1024, aligns=(128,))
    return pl.pallas_call(
        functools.partial(_linear_kernel, activation=activation),
        out_shape=jax.ShapeDtypeStruct((M, N), x2.dtype),
        grid=(M // tm, N // tn, K // tk),
        in_specs=[pl.BlockSpec((tm, tk), lambda i, j, k: (i, k)),
                  pl.BlockSpec((tk, tn), lambda i, j, k: (k, j)),
                  pl.BlockSpec((1, tn), lambda i, j, k: (0, j))],
        out_specs=pl.BlockSpec((tm, tn), lambda i, j, k: (i, j)),
        scratch_shapes=[pltpu.VMEM((tm, tn), jnp.float32)],
        compiler_params=pltpu.CompilerParams(
            dimension_semantics=("parallel", "parallel", "arbitrary"),
            vmem_limit_bytes=_VMEM_LIMIT),
    )(x2, w, b.reshape(1, N))


def lm_head(x2, head_w):
    """x2: (M, D) @ head_w where head_w is the pre-transposed (D, V) tied
    embedding.  Full-K contraction, vocab as the OUTER grid axis so the big
    weight panel is fetched once per vocab tile (DMA elided across M)."""
    M, D = x2.shape
    V = head_w.shape[1]
    tm = _tile(M, 256, aligns=(128, 8))
    tn = _tile(V, 512, aligns=(128,))
    return pl.pallas_call(
        _lm_head_kernel,
        out_shape=jax.ShapeDtypeStruct((M, V), x2.dtype),
        grid=(V // tn, M // tm),
        in_specs=[pl.BlockSpec((tm, D), lambda j, i: (i, 0)),
                  pl.BlockSpec((D, tn), lambda j, i: (0, j))],
        out_specs=pl.BlockSpec((tm, tn), lambda j, i: (i, j)),
        compiler_params=pltpu.CompilerParams(
            dimension_semantics=("parallel", "parallel"),
            vmem_limit_bytes=_VMEM_LIMIT),
    )(x2, head_w)


def causal_attention(qkv3):
    """qkv3: (3, B*H, T, Dh) -> (B*H, T, Dh); flash-style online softmax."""
    _, BH, T, Dh = qkv3.shape
    scale = 1.0 / math.sqrt(Dh)
    tq = _tile(T, 256, aligns=(128, 8))
    tkv = _tile(T, 256, aligns=(128, 8))

    def q_map(b, qi, ki):
        return (0, b, qi, 0)

    def kv_map(which):
        def f(b, qi, ki):
            # Clamp to the last causally-needed kv tile: skipped steps repeat
            # the previous block index so their DMA is elided.
            kv = jnp.minimum(ki, ((qi + 1) * tq - 1) // tkv)
            return (which, b, kv, 0)
        return f

    return pl.pallas_call(
        functools.partial(_flash_attn_kernel, scale=scale, tq=tq, tkv=tkv),
        out_shape=jax.ShapeDtypeStruct((BH, T, Dh), qkv3.dtype),
        grid=(BH, T // tq, T // tkv),
        in_specs=[pl.BlockSpec((1, 1, tq, Dh), q_map),
                  pl.BlockSpec((1, 1, tkv, Dh), kv_map(1)),
                  pl.BlockSpec((1, 1, tkv, Dh), kv_map(2))],
        out_specs=pl.BlockSpec((1, tq, Dh), lambda b, qi, ki: (b, qi, 0)),
        scratch_shapes=[pltpu.VMEM((tq, 1), jnp.float32),
                        pltpu.VMEM((tq, 1), jnp.float32),
                        pltpu.VMEM((tq, Dh), jnp.float32)],
        compiler_params=pltpu.CompilerParams(
            dimension_semantics=("parallel", "parallel", "arbitrary"),
            vmem_limit_bytes=_VMEM_LIMIT),
    )(qkv3, qkv3, qkv3)


# ----------------------------- model (glue) -----------------------------

def _attention_branch(h2, p, B, T, H, Dh):
    """LN'd input (B*T, D) -> attention output projection (B*T, D)."""
    D = H * Dh
    qkv = linear(h2, p["c_attn_w"], p["c_attn_b"])                 # (B*T, 3D)
    # single fused permute instead of split + three transposes
    qkv = qkv.reshape(B, T, 3, H, Dh).transpose(2, 0, 3, 1, 4)     # (3,B,H,T,Dh)
    qkv = qkv.reshape(3, B * H, T, Dh)
    o = causal_attention(qkv)                                      # (B*H, T, Dh)
    o = o.reshape(B, H, T, Dh).transpose(0, 2, 1, 3).reshape(B * T, D)
    return linear(o, p["out_w"], p["out_b"])                       # resid drop = id


def _ffn_branch(h2, p):
    h = linear(h2, p["fc1_w"], p["fc1_b"], activation="gelu_tanh")
    return linear(h, p["fc2_w"], p["fc2_b"])                       # resid drop = id


def gpt2_forward(idx, params, num_heads):
    B, T = idx.shape
    D = params["token_emb"].shape[1]
    H = num_heads
    Dh = D // H

    tok = jnp.take(params["token_emb"], idx, axis=0)               # (B, T, D)
    pos = params["pos_emb"][:T][None, :, :]                        # (1, T, D)
    res = (tok + pos).reshape(B * T, D)                            # embed drop = id

    pend = None   # pending residual-branch output, fused into the next LN
    for lp in params["layers"]:
        if pend is None:
            h = layernorm(res, lp["ln1_g"], lp["ln1_b"])
        else:
            res, h = add_layernorm(res, pend, lp["ln1_g"], lp["ln1_b"])
        o = _attention_branch(h, lp, B, T, H, Dh)
        res, h = add_layernorm(res, o, lp["ln2_g"], lp["ln2_b"])
        pend = _ffn_branch(h, lp)

    res, hf = add_layernorm(res, pend, params["lnf_g"], params["lnf_b"])
    V = params["head_w"].shape[1]
    logits = lm_head(hf, params["head_w"]).reshape(B, T, V)
    return logits


def init_params(key, *, vocab_size, embed_dim, num_layers, max_seq_len,
                dtype=jnp.float32):
    # match GPT2._init_weights: linear std = 0.02/sqrt(2*num_layers), emb std = 0.02
    if vocab_size % 64 != 0:
        vocab_size += 64 - vocab_size % 64
    lin_std = 0.02 / math.sqrt(2 * num_layers)
    keys = iter(jax.random.split(key, 64))

    def lin(din, dout):
        w = lin_std * jax.random.normal(next(keys), (din, dout), dtype)
        b = jnp.zeros((dout,), dtype)
        return w, b

    token_emb = 0.02 * jax.random.normal(next(keys), (vocab_size, embed_dim), dtype)
    params = {
        "token_emb": token_emb,
        # tied lm head, pre-transposed ONCE to (D, V) so the lm_head kernel
        # needs no per-tile transpose and no .T materialization per forward
        "head_w": token_emb.T,
        "pos_emb": 0.02 * jax.random.normal(next(keys), (max_seq_len, embed_dim), dtype),
        "lnf_g": jnp.ones((embed_dim,), dtype),
        "lnf_b": jnp.zeros((embed_dim,), dtype),
        "layers": [],
    }
    for _ in range(num_layers):
        c_attn_w, c_attn_b = lin(embed_dim, 3 * embed_dim)
        out_w, out_b = lin(embed_dim, embed_dim)
        fc1_w, fc1_b = lin(embed_dim, 4 * embed_dim)
        fc2_w, fc2_b = lin(4 * embed_dim, embed_dim)
        params["layers"].append({
            "ln1_g": jnp.ones((embed_dim,), dtype), "ln1_b": jnp.zeros((embed_dim,), dtype),
            "ln2_g": jnp.ones((embed_dim,), dtype), "ln2_b": jnp.zeros((embed_dim,), dtype),
            "c_attn_w": c_attn_w, "c_attn_b": c_attn_b,
            "out_w": out_w, "out_b": out_b,
            "fc1_w": fc1_w, "fc1_b": fc1_b,
            "fc2_w": fc2_w, "fc2_b": fc2_b,
        })
    return params, vocab_size


if __name__ == "__main__":
    # small config consistent with the module
    vocab_size = 100          # padded to 128 inside init (matches reference behavior)
    embed_dim = 32
    num_heads = 4
    num_layers = 2
    max_seq_len = 16
    B, T = 2, 8

    key = jax.random.PRNGKey(0)
    pkey, ikey = jax.random.split(key)
    params, padded_vocab = init_params(
        pkey, vocab_size=vocab_size, embed_dim=embed_dim,
        num_layers=num_layers, max_seq_len=max_seq_len)

    idx = jax.random.randint(ikey, (B, T), 0, vocab_size, dtype=jnp.int32)

    logits = gpt2_forward(idx, params, num_heads)
    jax.block_until_ready(logits)
    assert logits.shape == (B, T, padded_vocab), logits.shape
    assert bool(jnp.all(jnp.isfinite(logits)))
    print("KERNEL_OK")
</pallas_src>

<mosaic_0001>
module attributes {stable_mosaic.version = 11 : i64} {
  func.func @_layernorm_kernel(%arg0: i32, %arg1: memref<16x32xf32, #tpu.memory_space<vmem>>, %arg2: memref<1x32xf32, #tpu.memory_space<vmem>>, %arg3: memref<1x32xf32, #tpu.memory_space<vmem>>, %arg4: memref<16x32xf32, #tpu.memory_space<vmem>>) attributes {dimension_semantics = [#tpu.dimension_semantics<parallel>], iteration_bounds = array<i64: 1>, scalar_prefetch = 0 : i64, scratch_operands = 0 : i64, tpu.core_type = #tpu.core_type<tc>, window_params = [{transform_indices = @transform_0, window_bounds = array<i64: 16, 32>}, {pipeline_mode = #tpu.pipeline_mode<synchronous>, transform_indices = @transform_1, window_bounds = array<i64: 1, 32>}, {pipeline_mode = #tpu.pipeline_mode<synchronous>, transform_indices = @transform_2, window_bounds = array<i64: 1, 32>}, {transform_indices = @transform_3, window_bounds = array<i64: 16, 32>}]} {
    %c0 = arith.constant 0 : index
    %c0_0 = arith.constant 0 : index
    %0 = vector.load %arg1[%c0, %c0_0] : memref<16x32xf32, #tpu.memory_space<vmem>>, vector<16x32xf32>
    %cst = arith.constant dense<0.000000e+00> : vector<16xf32>
    %1 = vector.multi_reduction <add>, %0, %cst [1] : vector<16x32xf32> to vector<16xf32>
    %2 = vector.shape_cast %1 : vector<16xf32> to vector<16x1xf32>
    %cst_1 = arith.constant 3.200000e+01 : f32
    %3 = vector.broadcast %cst_1 : f32 to vector<16x1xf32>
    %4 = arith.divf %2, %3 : vector<16x1xf32>
    %5 = vector.broadcast %4 : vector<16x1xf32> to vector<16x32xf32>
    %6 = arith.subf %0, %5 : vector<16x32xf32>
    %7 = arith.mulf %6, %6 : vector<16x32xf32>
    %cst_2 = arith.constant dense<0.000000e+00> : vector<16xf32>
    %8 = vector.multi_reduction <add>, %7, %cst_2 [1] : vector<16x32xf32> to vector<16xf32>
    %9 = vector.shape_cast %8 : vector<16xf32> to vector<16x1xf32>
    %cst_3 = arith.constant 3.200000e+01 : f32
    %10 = vector.broadcast %cst_3 : f32 to vector<16x1xf32>
    %11 = arith.divf %9, %10 : vector<16x1xf32>
    %12 = vector.broadcast %4 : vector<16x1xf32> to vector<16x32xf32>
    %13 = arith.subf %0, %12 : vector<16x32xf32>
    %cst_4 = arith.constant 9.99999974E-6 : f32
    %14 = vector.broadcast %cst_4 : f32 to vector<16x1xf32>
    %15 = arith.addf %11, %14 : vector<16x1xf32>
    %16 = math.rsqrt %15 : vector<16x1xf32>
    %17 = vector.broadcast %16 : vector<16x1xf32> to vector<16x32xf32>
    %18 = arith.mulf %13, %17 : vector<16x32xf32>
    %c0_5 = arith.constant 0 : index
    %c0_6 = arith.constant 0 : index
    %19 = vector.load %arg2[%c0_5, %c0_6] : memref<1x32xf32, #tpu.memory_space<vmem>>, vector<1x32xf32>
    %20 = vector.broadcast %19 : vector<1x32xf32> to vector<16x32xf32>
    %21 = arith.mulf %18, %20 : vector<16x32xf32>
    %c0_7 = arith.constant 0 : index
    %c0_8 = arith.constant 0 : index
    %22 = vector.load %arg3[%c0_7, %c0_8] : memref<1x32xf32, #tpu.memory_space<vmem>>, vector<1x32xf32>
    %23 = vector.broadcast %22 : vector<1x32xf32> to vector<16x32xf32>
    %24 = arith.addf %21, %23 : vector<16x32xf32>
    %c0_9 = arith.constant 0 : index
    %c0_10 = arith.constant 0 : index
    %25 = vector.load %arg4[%c0_9, %c0_10] : memref<16x32xf32, #tpu.memory_space<vmem>>, vector<16x32xf32>
    tpu.vector_store %arg4[%c0_9, %c0_10], %24 {strides = array<i32>} : memref<16x32xf32, #tpu.memory_space<vmem>>, vector<16x32xf32>,
    return
  }
  func.func @transform_0(%arg0: i32) -> (i32, i32) {
    %c0_i32 = arith.constant 0 : i32
    %c0_i32_0 = arith.constant 0 : i32
    return %arg0, %c0_i32 : i32, i32
  }
  func.func @transform_1(%arg0: i32) -> (i32, i32) {
    %c0_i32 = arith.constant 0 : i32
    %c0_i32_0 = arith.constant 0 : i32
    %c0_i32_1 = arith.constant 0 : i32
    return %c0_i32, %c0_i32_0 : i32, i32
  }
  func.func @transform_2(%arg0: i32) -> (i32, i32) {
    %c0_i32 = arith.constant 0 : i32
    %c0_i32_0 = arith.constant 0 : i32
    %c0_i32_1 = arith.constant 0 : i32
    return %c0_i32, %c0_i32_0 : i32, i32
  }
  func.func @transform_3(%arg0: i32) -> (i32, i32) {
    %c0_i32 = arith.constant 0 : i32
    %c0_i32_0 = arith.constant 0 : i32
    return %arg0, %c0_i32 : i32, i32
  }
}

</mosaic_0001>

<llo_original>
// kernel: tpu_custom_call.1
$region0: #{tpu_custom_call.1}
  #allocation0 [shape = 'u32[]', space=smem, size = 0x4, offset = 0x4, fixed_abs, tag = 'smem constant byte address 0x4 - core index']
  #allocation1 [shape = 'u32[72,128]{1,0:T(1,128)}', space=vmem, size = 0x9000, scoped, tag = 'internal scratch']
  %s0 = inlined_call_operand.hbm [shape: f32[16,32], index: 0, kind: input, shape index: {}]
  %s1 = inlined_call_operand.hbm [shape: f32[1,32], index: 1, kind: input, shape index: {}]
  %s2 = inlined_call_operand.vmem [shape: f32[1,32], index: 2, kind: input, shape index: {}]
  %s3 = inlined_call_operand.hbm [shape: f32[16,32], index: 3, kind: output, shape index: {}]
  %s4 = sld [smem:[#allocation0]]
  $region30: #{tpu_custom_call.1} parent=0
    _
  %s6 = ssub.s32 1, %s4
  %s7 = scalar_select 0, %s6, %s4
  $region1: #{tpu_custom_call.1} parent=0
    #allocation2 [shape = 'u8[8192]{0}', space=vmem, size = 0x2000, scoped, tag = 'input window, operand 0, single buffered']
    #allocation3 [shape = 's32[1]{0}', space=sflag, size = 0x4, scoped, tag = 'scoped memory for tpu_custom_call.1']
    #allocation4 [shape = 's32[1]{0}', space=sflag, size = 0x4, scoped, tag = 'scoped memory for tpu_custom_call.1']
    #allocation5 [shape = 'u8[512]{0}', space=vmem, size = 0x400, scoped, tag = 'input window, operand 1, single buffered']
    #allocation6 [shape = 's32[1]{0}', space=sflag, size = 0x4, scoped, tag = 'scoped memory for tpu_custom_call.1']
    #allocation7 [shape = 'u8[8192]{0}', space=vmem, size = 0x2000, scoped, tag = 'output window, operand 0, single buffered']
    %8 = vsyncpa [#allocation3], 0
    %9 = vsyncpa [#allocation6], 0
    %10 = vsyncpa [#allocation4], 0
    // Predicated region
    $region2: #{tpu_custom_call.1} parent=1 // pred_check
      _
    $region3: #{tpu_custom_call.1} parent=1 // pred_check_branch
      %12 = sbr.rel (0) target = $region5
    $region4: #{tpu_custom_call.1} parent=1 // pred_region
      %14 = vsyncadd [#allocation3], 0
      %s15 = sshll.u32 %s0, 4
      %s16 = int_to_ptr.hbm [resolvable:$true] %s15
      %s17 = sshll.u32 [#allocation2], 4
      %s18 = int_to_ptr.vmem [resolvable:$true] %s17
      %23 = dma.hbm_to_vmem [thread:$0]  %s16, 256, %s18, [#allocation3], 128, 128, 8
    $region5: #{tpu_custom_call.1} parent=1 // pred_fallthru
      _
    // Predicated region
    $region6: #{tpu_custom_call.1} parent=1 // pred_check
      _
    $region7: #{tpu_custom_call.1} parent=1 // pred_check_branch
      %25 = sbr.rel (0) target = $region9
    $region8: #{tpu_custom_call.1} parent=1 // pred_region
      %27 = vsyncadd [#allocation6], 0
      %s29 = sshll.u32 %s1, 4
      %s30 = int_to_ptr.hbm [resolvable:$true] %s29
      %s31 = sshll.u32 [#allocation5], 4
      %s32 = int_to_ptr.vmem [resolvable:$true] %s31
      %34 = dma.hbm_to_vmem [thread:$0]  %s30, 16, %s32, [#allocation6]
    $region9: #{tpu_custom_call.1} parent=1 // pred_fallthru
      _
    // Predicated region
    $region10: #{tpu_custom_call.1} parent=1 // pred_check
      _
    $region11: #{tpu_custom_call.1} parent=1 // pred_check_branch
      %36 = sbr.rel (0) target = $region13
    $region12: #{tpu_custom_call.1} parent=1 // pred_region
      _
    $region13: #{tpu_custom_call.1} parent=1 // pred_fallthru
      _
    // Predicated region
    $region14: #{tpu_custom_call.1} parent=1 // pred_check
      _
    $region15: #{tpu_custom_call.1} parent=1 // pred_check_branch
      %38 = sbr.rel (0) target = $region17
    $region16: #{tpu_custom_call.1} parent=1 // pred_region
      %40 = dma.done [#allocation3], 256
    $region17: #{tpu_custom_call.1} parent=1 // pred_fallthru
      _
    // Predicated region
    $region18: #{tpu_custom_call.1} parent=1 // pred_check
      _
    $region19: #{tpu_custom_call.1} parent=1 // pred_check_branch
      %42 = sbr.rel (0) target = $region21
    $region20: #{tpu_custom_call.1} parent=1 // pred_region
      %44 = dma.done [#allocation6], 16
    $region21: #{tpu_custom_call.1} parent=1 // pred_fallthru
      _
    %v45 = vld [vmem:[#allocation2] sm:$0xff]
    %v46 = vld [vmem:[#allocation2 + $0x8] sm:$0xff]
    %vm47 = vcmask 261120
    %v48 = vsel %vm47, %v45, 0.0
    %49 = vadd.xlane.f32.xlu0 %v48
    %v50 = vpop.xlane.xlu0 %49
    %v51 = vsel %vm47, %v46, 0.0
    %52 = vadd.xlane.f32.xlu0 %v51
    %v53 = vpop.xlane.xlu0 %52
    %v54 = vrcp.pop 32.0
    %v55 = vmul.f32 32.0, %v54
    %v56 = vsub.f32 1.0, %v55
    %v57 = vmul.f32 %v54, %v56
    %v58 = vadd.f32 %v54, %v57
    %vm59 = vweird.f32 %v54
    %v60 = vsel %vm59, %v54, %v58
    %v61 = vmul.f32 %v50, %v60
    %v62 = vmul.f32 %v53, %v60
    %v63 = vsub.f32 %v45, %v61
    %v64 = vsub.f32 %v46, %v62
    %v65 = vmul.f32 %v63, %v63
    %v66 = vmul.f32 %v64, %v64
    %v67 = vsel %vm47, %v65, 0.0
    %68 = vadd.xlane.f32.xlu0 %v67
    %v69 = vpop.xlane.xlu0 %68
    %v70 = vsel %vm47, %v66, 0.0
    %71 = vadd.xlane.f32.xlu0 %v70
    %v72 = vpop.xlane.xlu0 %71
    %v73 = vmul.f32 %v69, %v60
    %v74 = vmul.f32 %v72, %v60
    %v75 = vadd.f32 %v73, 1e-05
    %v76 = vadd.f32 %v74, 1e-05
    %v77 = vrsqrt.pop %v75
    %v78 = vmul.f32 %v77, %v75
    %v79 = vmul.f32 %v78, %v77
    %v80 = vmul.f32 0.5, %v79
    %v81 = vsub.f32 1.5, %v80
    %v82 = vmul.f32 %v77, %v81
    %vm83 = vweird.f32 %v75
    %vm84 = vweird.f32 %v77
    %vm85 = vmor %vm83, %vm84
    %v86 = vsel %vm85, %v77, %v82
    %v87 = vrsqrt.pop %v76
    %v88 = vmul.f32 %v87, %v76
    %v89 = vmul.f32 %v88, %v87
    %v90 = vmul.f32 0.5, %v89
    %v91 = vsub.f32 1.5, %v90
    %v92 = vmul.f32 %v87, %v91
    %vm93 = vweird.f32 %v76
    %vm94 = vweird.f32 %v87
    %vm95 = vmor %vm93, %vm94
    %v96 = vsel %vm95, %v87, %v92
    %v97 = vmul.f32 %v63, %v86
    %v98 = vmul.f32 %v64, %v96
    %v99 = vld [vmem:[#allocation5] sm:$0x1]
    %v101 = vperm.slane %v99, 0
    %v103 = vmul.f32 %v97, %v101
    %v104 = vmul.f32 %v98, %v101
    %v105 = vld [vmem:[%s2] sm:$0x1]
    %v107 = vperm.slane %v105, 0
    %v109 = vadd.f32 %v103, %v107
    %v110 = vadd.f32 %v104, %v107
    %111 = vst.msk [vmem:[#allocation7] sm:$0xff] %vm47, %v109
    %112 = vst.msk [vmem:[#allocation7 + $0x8] sm:$0xff] %vm47, %v110
    // Predicated region
    $region22: #{tpu_custom_call.1} parent=1 // pred_check
      _
    $region23: #{tpu_custom_call.1} parent=1 // pred_check_branch
      %114 = sbr.rel (0) target = $region25
    $region24: #{tpu_custom_call.1} parent=1 // pred_region
      %116 = vsyncadd [#allocation4], 0
      %s117 = sshll.u32 [#allocation7], 4
      %s118 = int_to_ptr.vmem [resolvable:$true] %s117
      %s119 = sshll.u32 %s3, 4
      %s120 = int_to_ptr.hbm [resolvable:$true] %s119
      %125 = dma.vmem_to_hbm [thread:$0]  %s118, 256, %s120, [#allocation4], 128, 128, 8
    $region25: #{tpu_custom_call.1} parent=1 // pred_fallthru
      _
    // Predicated region
    $region26: #{tpu_custom_call.1} parent=1 // pred_check
      _
    $region27: #{tpu_custom_call.1} parent=1 // pred_check_branch
      %127 = sbr.rel (0) target = $region29
    $region28: #{tpu_custom_call.1} parent=1 // pred_region
      %129 = dma.done [#allocation4], 256
    $region29: #{tpu_custom_call.1} parent=1 // pred_fallthru
      _
    %130 = vsyncpa [#allocation3], 1
    %131 = vsyncpa [#allocation6], 1
    %132 = vsyncpa [#allocation4], 1

</llo_original>
